<compile_context>
chip_gen: v7x
topology: tpu7x:2x2x1
jax: 0.10.0
libtpu: 0.0.40
codegen_flags: <defaults>
</compile_context>

<pallas_src>
import functools

import jax
import jax.numpy as jnp
from jax.experimental import pallas as pl
from jax.experimental.pallas import tpu as pltpu

BIAS_FINAL_INIT = 0.03
WEIGHTS_FINAL_INIT = 0.3


def _elu(x):
    # torch.nn.ELU (alpha=1.0). Clamp so the unselected branch never computes exp of a
    # large positive value (wasted EUP work / inf in dead lanes).
    # TODO(synk): switch to jnp.expm1 (exact torch semantics near 0) once Mosaic lowering
    # for expm1 is confirmed; exp(x)-1 differs only by ~1e-7 absolute here.
    return jnp.where(x > 0.0, x, jnp.exp(jnp.minimum(x, 0.0)) - 1.0)


def critic_kernel(num_hidden, s_ref, a_ref, w1s_ref, w1a_ref, b1_ref, *refs):
    """One batch-block (TB rows) per grid step; all weights VMEM-resident.

    refs layout: [wh_i, bh_i] * num_hidden, wf_row, bf, out_ref
    """
    out_ref = refs[-1]

    # First layer with torch.cat folded into two matmuls on the split W1:
    #   (TB, S) @ (S, H) + (TB, A) @ (A, H) + b1
    h = jnp.dot(s_ref[...], w1s_ref[...], preferred_element_type=jnp.float32)
    h = h + jnp.dot(a_ref[...], w1a_ref[...], preferred_element_type=jnp.float32)
    h = _elu(h + b1_ref[...])

    idx = 0
    for _ in range(num_hidden):
        w, b = refs[idx], refs[idx + 1]
        idx += 2
        h = _elu(jnp.dot(h, w[...], preferred_element_type=jnp.float32) + b[...])

    wf_row, bf = refs[idx], refs[idx + 1]
    # Final Linear(H, 1) as an NT matmul: (1,H) @ (TB,H)^T -> (1,TB).
    # Emits one lane-dense row per block (no 1-lane masked stores).
    row = jax.lax.dot_general(
        wf_row[...], h, (((1,), (1,)), ((), ())),
        preferred_element_type=jnp.float32,
    )
    out_ref[...] = (row + bf[...])[None].astype(out_ref.dtype)


def _round_up(x, m):
    return ((x + m - 1) // m) * m


def critic_forward(states, actions, params, *, block_batch=256):
    B, state_dim = states.shape
    action_dim = actions.shape[1]
    H = params["w1"].shape[1]
    num_hidden = len(params["hidden"])

    states = states.astype(jnp.float32)
    actions = actions.astype(jnp.float32)
    w1s = params["w1"][:state_dim]
    w1a = params["w1"][state_dim:]

    tb = _round_up(min(block_batch, _round_up(B, 8)), 8)
    nb = pl.cdiv(B, tb)
    b_pad = nb * tb
    if b_pad != B:
        states = jnp.pad(states, ((0, b_pad - B), (0, 0)))
        actions = jnp.pad(actions, ((0, b_pad - B), (0, 0)))

    args = [states, actions, w1s, w1a, params["b1"]]
    for w, b in params["hidden"]:
        args.extend([w, b])
    args.extend([params["wf_row"], params["bf"]])

    const2d = lambda i: (0, 0)  # weights/biases: resident across grid steps
    in_specs = [
        pl.BlockSpec((tb, state_dim), lambda i: (i, 0)),
        pl.BlockSpec((tb, action_dim), lambda i: (i, 0)),
    ]
    in_specs += [pl.BlockSpec(a.shape, const2d) for a in args[2:]]

    in_dim = state_dim + action_dim
    flops = b_pad * (2 * in_dim * H + num_hidden * 2 * H * H + 2 * H)
    transcendentals = b_pad * H * (num_hidden + 1)
    bytes_accessed = sum(int(a.size) * a.dtype.itemsize for a in args) + b_pad * 4

    out = pl.pallas_call(
        functools.partial(critic_kernel, num_hidden),
        out_shape=jax.ShapeDtypeStruct((nb, 1, tb), jnp.float32),
        grid=(nb,),
        in_specs=in_specs,
        out_specs=pl.BlockSpec((1, 1, tb), lambda i: (i, 0, 0)),
        compiler_params=pltpu.CompilerParams(dimension_semantics=("parallel",)),
        cost_estimate=pl.CostEstimate(
            flops=flops,
            transcendentals=transcendentals,
            bytes_accessed=bytes_accessed,
        ),
    )(*args)

    # (nb, 1, tb) lane-dense slab -> (B, 1) column (drop batch padding).
    return out.reshape(-1)[:B].reshape(B, 1)


def init_params(key, state_dim, action_dim, hidden_dim, num_layers):
    """Deterministic synthetic init mirroring the PyTorch module's shapes.

    Intermediate layers: uniform(-1/sqrt(fan_in), 1/sqrt(fan_in)) (PyTorch default).
    Final layer: uniform(-WEIGHTS_FINAL_INIT, .) weight, uniform(-BIAS_FINAL_INIT, .) bias.
    Weights stored as (in_features, out_features) so y = x @ W + b; the final weight is
    stored as a (1, hidden) row for the in-kernel NT matmul.
    """
    in_dim = state_dim + action_dim
    keys = jax.random.split(key, 2 * (num_layers + 1))

    b1 = 1.0 / float(in_dim) ** 0.5
    w1 = jax.random.uniform(keys[0], (in_dim, hidden_dim), jnp.float32, -b1, b1)
    bias1 = jax.random.uniform(keys[1], (1, hidden_dim), jnp.float32, -b1, b1)

    hidden = []
    bh = 1.0 / float(hidden_dim) ** 0.5
    for i in range(num_layers - 1):
        w = jax.random.uniform(keys[2 + 2 * i], (hidden_dim, hidden_dim), jnp.float32, -bh, bh)
        b = jax.random.uniform(keys[3 + 2 * i], (1, hidden_dim), jnp.float32, -bh, bh)
        hidden.append((w, b))

    wf_row = jax.random.uniform(
        keys[-2], (1, hidden_dim), jnp.float32, -WEIGHTS_FINAL_INIT, WEIGHTS_FINAL_INIT
    )
    bf = jax.random.uniform(
        keys[-1], (1, 1), jnp.float32, -BIAS_FINAL_INIT, BIAS_FINAL_INIT
    )
    return dict(w1=w1, b1=bias1, hidden=hidden, wf_row=wf_row, bf=bf)


def critic_reference(states, actions, params):
    """Pure-JAX reference matching the PyTorch forward semantics."""
    x = jnp.concatenate([states, actions], axis=-1)
    h = _elu(x @ params["w1"] + params["b1"])
    for w, b in params["hidden"]:
        h = _elu(h @ w + b)
    return h @ params["wf_row"].T + params["bf"]


if __name__ == "__main__":
    # Small shapes consistent with the module: state_dim=24, action_dim=8,
    # hidden_dim=32, num_layers=3 (=> two Linear(32->32) after the input layer).
    # batch=40 with block_batch=16 exercises the batch grid (3 steps) and padding.
    batch, state_dim, action_dim = 40, 24, 8
    hidden_dim, num_layers = 32, 3

    key = jax.random.PRNGKey(0)
    k_states, k_actions, k_params = jax.random.split(key, 3)

    states = jax.random.normal(k_states, (batch, state_dim), jnp.float32)
    actions = jax.random.normal(k_actions, (batch, action_dim), jnp.float32)
    params = init_params(k_params, state_dim, action_dim, hidden_dim, num_layers)

    out = critic_forward(states, actions, params, block_batch=16)
    out = jax.block_until_ready(out)

    ref = critic_reference(states, actions, params)
    assert out.shape == (batch, 1), out.shape
    assert jnp.allclose(out, ref, atol=1e-5, rtol=1e-5), (out, ref)

    print("KERNEL_OK")
</pallas_src>

<mosaic_0001>
module attributes {stable_mosaic.version = 11 : i64} {
  func.func @critic_kernel(%arg0: i32, %arg1: memref<16x24xf32, #tpu.memory_space<vmem>>, %arg2: memref<16x8xf32, #tpu.memory_space<vmem>>, %arg3: memref<24x32xf32, #tpu.memory_space<vmem>>, %arg4: memref<8x32xf32, #tpu.memory_space<vmem>>, %arg5: memref<1x32xf32, #tpu.memory_space<vmem>>, %arg6: memref<32x32xf32, #tpu.memory_space<vmem>>, %arg7: memref<1x32xf32, #tpu.memory_space<vmem>>, %arg8: memref<32x32xf32, #tpu.memory_space<vmem>>, %arg9: memref<1x32xf32, #tpu.memory_space<vmem>>, %arg10: memref<1x32xf32, #tpu.memory_space<vmem>>, %arg11: memref<1x1xf32, #tpu.memory_space<vmem>>, %arg12: memref<1x1x16xf32, #tpu.memory_space<vmem>>) attributes {dimension_semantics = [#tpu.dimension_semantics<parallel>], iteration_bounds = array<i64: 3>, scalar_prefetch = 0 : i64, scratch_operands = 0 : i64, tpu.core_type = #tpu.core_type<tc>, window_params = [{transform_indices = @transform_0, window_bounds = array<i64: 16, 24>}, {transform_indices = @transform_1, window_bounds = array<i64: 16, 8>}, {pipeline_mode = #tpu.pipeline_mode<synchronous>, transform_indices = @transform_2, window_bounds = array<i64: 24, 32>}, {pipeline_mode = #tpu.pipeline_mode<synchronous>, transform_indices = @transform_3, window_bounds = array<i64: 8, 32>}, {pipeline_mode = #tpu.pipeline_mode<synchronous>, transform_indices = @transform_4, window_bounds = array<i64: 1, 32>}, {pipeline_mode = #tpu.pipeline_mode<synchronous>, transform_indices = @transform_5, window_bounds = array<i64: 32, 32>}, {pipeline_mode = #tpu.pipeline_mode<synchronous>, transform_indices = @transform_6, window_bounds = array<i64: 1, 32>}, {pipeline_mode = #tpu.pipeline_mode<synchronous>, transform_indices = @transform_7, window_bounds = array<i64: 32, 32>}, {pipeline_mode = #tpu.pipeline_mode<synchronous>, transform_indices = @transform_8, window_bounds = array<i64: 1, 32>}, {pipeline_mode = #tpu.pipeline_mode<synchronous>, transform_indices = @transform_9, window_bounds = array<i64: 1, 32>}, {pipeline_mode = #tpu.pipeline_mode<synchronous>, transform_indices = @transform_10, window_bounds = array<i64: 1, 1>}, {transform_indices = @transform_11, window_bounds = array<i64: 1, 1, 16>}]} {
    %c0 = arith.constant 0 : index
    %c0_0 = arith.constant 0 : index
    %0 = vector.load %arg1[%c0, %c0_0] : memref<16x24xf32, #tpu.memory_space<vmem>>, vector<16x24xf32>
    %c0_1 = arith.constant 0 : index
    %c0_2 = arith.constant 0 : index
    %1 = vector.load %arg3[%c0_1, %c0_2] : memref<24x32xf32, #tpu.memory_space<vmem>>, vector<24x32xf32>
    %cst = arith.constant dense<0.000000e+00> : vector<16x32xf32>
    %2 = tpu.matmul %0, %1, %cst {dimension_numbers = #tpu.dot_dimension_numbers<[1], [0], [0], [1], [0, 0, 1, 1], [], []>} : vector<16x24xf32>, vector<24x32xf32>, vector<16x32xf32> -> vector<16x32xf32>
    %c0_3 = arith.constant 0 : index
    %c0_4 = arith.constant 0 : index
    %3 = vector.load %arg2[%c0_3, %c0_4] : memref<16x8xf32, #tpu.memory_space<vmem>>, vector<16x8xf32>
    %c0_5 = arith.constant 0 : index
    %c0_6 = arith.constant 0 : index
    %4 = vector.load %arg4[%c0_5, %c0_6] : memref<8x32xf32, #tpu.memory_space<vmem>>, vector<8x32xf32>
    %cst_7 = arith.constant dense<0.000000e+00> : vector<16x32xf32>
    %5 = tpu.matmul %3, %4, %cst_7 {dimension_numbers = #tpu.dot_dimension_numbers<[1], [0], [0], [1], [0, 0, 1, 1], [], []>} : vector<16x8xf32>, vector<8x32xf32>, vector<16x32xf32> -> vector<16x32xf32>
    %6 = arith.addf %2, %5 : vector<16x32xf32>
    %c0_8 = arith.constant 0 : index
    %c0_9 = arith.constant 0 : index
    %7 = vector.load %arg5[%c0_8, %c0_9] : memref<1x32xf32, #tpu.memory_space<vmem>>, vector<1x32xf32>
    %8 = vector.broadcast %7 : vector<1x32xf32> to vector<16x32xf32>
    %9 = arith.addf %6, %8 : vector<16x32xf32>
    %cst_10 = arith.constant 0.000000e+00 : f32
    %10 = vector.broadcast %cst_10 : f32 to vector<16x32xf32>
    %11 = arith.cmpf ogt, %9, %10 : vector<16x32xf32>
    %cst_11 = arith.constant 0.000000e+00 : f32
    %12 = vector.broadcast %cst_11 : f32 to vector<16x32xf32>
    %13 = arith.minimumf %9, %12 : vector<16x32xf32>
    %14 = math.exp %13 : vector<16x32xf32>
    %cst_12 = arith.constant 1.000000e+00 : f32
    %15 = vector.broadcast %cst_12 : f32 to vector<16x32xf32>
    %16 = arith.subf %14, %15 : vector<16x32xf32>
    %17 = arith.select %11, %9, %16 : vector<16x32xi1>, vector<16x32xf32>
    %c0_13 = arith.constant 0 : index
    %c0_14 = arith.constant 0 : index
    %18 = vector.load %arg6[%c0_13, %c0_14] : memref<32x32xf32, #tpu.memory_space<vmem>>, vector<32x32xf32>
    %cst_15 = arith.constant dense<0.000000e+00> : vector<16x32xf32>
    %19 = tpu.matmul %17, %18, %cst_15 {dimension_numbers = #tpu.dot_dimension_numbers<[1], [0], [0], [1], [0, 0, 1, 1], [], []>} : vector<16x32xf32>, vector<32x32xf32>, vector<16x32xf32> -> vector<16x32xf32>
    %c0_16 = arith.constant 0 : index
    %c0_17 = arith.constant 0 : index
    %20 = vector.load %arg7[%c0_16, %c0_17] : memref<1x32xf32, #tpu.memory_space<vmem>>, vector<1x32xf32>
    %21 = vector.broadcast %20 : vector<1x32xf32> to vector<16x32xf32>
    %22 = arith.addf %19, %21 : vector<16x32xf32>
    %cst_18 = arith.constant 0.000000e+00 : f32
    %23 = vector.broadcast %cst_18 : f32 to vector<16x32xf32>
    %24 = arith.cmpf ogt, %22, %23 : vector<16x32xf32>
    %cst_19 = arith.constant 0.000000e+00 : f32
    %25 = vector.broadcast %cst_19 : f32 to vector<16x32xf32>
    %26 = arith.minimumf %22, %25 : vector<16x32xf32>
    %27 = math.exp %26 : vector<16x32xf32>
    %cst_20 = arith.constant 1.000000e+00 : f32
    %28 = vector.broadcast %cst_20 : f32 to vector<16x32xf32>
    %29 = arith.subf %27, %28 : vector<16x32xf32>
    %30 = arith.select %24, %22, %29 : vector<16x32xi1>, vector<16x32xf32>
    %c0_21 = arith.constant 0 : index
    %c0_22 = arith.constant 0 : index
    %31 = vector.load %arg8[%c0_21, %c0_22] : memref<32x32xf32, #tpu.memory_space<vmem>>, vector<32x32xf32>
    %cst_23 = arith.constant dense<0.000000e+00> : vector<16x32xf32>
    %32 = tpu.matmul %30, %31, %cst_23 {dimension_numbers = #tpu.dot_dimension_numbers<[1], [0], [0], [1], [0, 0, 1, 1], [], []>} : vector<16x32xf32>, vector<32x32xf32>, vector<16x32xf32> -> vector<16x32xf32>
    %c0_24 = arith.constant 0 : index
    %c0_25 = arith.constant 0 : index
    %33 = vector.load %arg9[%c0_24, %c0_25] : memref<1x32xf32, #tpu.memory_space<vmem>>, vector<1x32xf32>
    %34 = vector.broadcast %33 : vector<1x32xf32> to vector<16x32xf32>
    %35 = arith.addf %32, %34 : vector<16x32xf32>
    %cst_26 = arith.constant 0.000000e+00 : f32
    %36 = vector.broadcast %cst_26 : f32 to vector<16x32xf32>
    %37 = arith.cmpf ogt, %35, %36 : vector<16x32xf32>
    %cst_27 = arith.constant 0.000000e+00 : f32
    %38 = vector.broadcast %cst_27 : f32 to vector<16x32xf32>
    %39 = arith.minimumf %35, %38 : vector<16x32xf32>
    %40 = math.exp %39 : vector<16x32xf32>
    %cst_28 = arith.constant 1.000000e+00 : f32
    %41 = vector.broadcast %cst_28 : f32 to vector<16x32xf32>
    %42 = arith.subf %40, %41 : vector<16x32xf32>
    %43 = arith.select %37, %35, %42 : vector<16x32xi1>, vector<16x32xf32>
    %c0_29 = arith.constant 0 : index
    %c0_30 = arith.constant 0 : index
    %44 = vector.load %arg10[%c0_29, %c0_30] : memref<1x32xf32, #tpu.memory_space<vmem>>, vector<1x32xf32>
    %cst_31 = arith.constant dense<0.000000e+00> : vector<1x16xf32>
    %45 = tpu.matmul %44, %43, %cst_31 {dimension_numbers = #tpu.dot_dimension_numbers<[1], [1], [0], [0], [0, 0, 1, 0], [], []>} : vector<1x32xf32>, vector<16x32xf32>, vector<1x16xf32> -> vector<1x16xf32>
    %c0_32 = arith.constant 0 : index
    %c0_33 = arith.constant 0 : index
    %46 = vector.load %arg11[%c0_32, %c0_33] : memref<1x1xf32, #tpu.memory_space<vmem>>, vector<1x1xf32>
    %47 = vector.broadcast %46 : vector<1x1xf32> to vector<1x16xf32>
    %48 = arith.addf %45, %47 : vector<1x16xf32>
    %49 = vector.shape_cast %48 : vector<1x16xf32> to vector<1x1x16xf32>
    %c0_34 = arith.constant 0 : index
    %c0_35 = arith.constant 0 : index
    %c0_36 = arith.constant 0 : index
    %50 = vector.load %arg12[%c0_34, %c0_35, %c0_36] : memref<1x1x16xf32, #tpu.memory_space<vmem>>, vector<1x1x16xf32>
    tpu.vector_store %arg12[%c0_34, %c0_35, %c0_36], %49 {strides = array<i32>} : memref<1x1x16xf32, #tpu.memory_space<vmem>>, vector<1x1x16xf32>,
    return
  }
  func.func @transform_0(%arg0: i32) -> (i32, i32) {
    %c0_i32 = arith.constant 0 : i32
    %c0_i32_0 = arith.constant 0 : i32
    return %arg0, %c0_i32 : i32, i32
  }
  func.func @transform_1(%arg0: i32) -> (i32, i32) {
    %c0_i32 = arith.constant 0 : i32
    %c0_i32_0 = arith.constant 0 : i32
    return %arg0, %c0_i32 : i32, i32
  }
  func.func @transform_2(%arg0: i32) -> (i32, i32) {
    %c0_i32 = arith.constant 0 : i32
    %c0_i32_0 = arith.constant 0 : i32
    %c0_i32_1 = arith.constant 0 : i32
    return %c0_i32, %c0_i32_0 : i32, i32
  }
  func.func @transform_3(%arg0: i32) -> (i32, i32) {
    %c0_i32 = arith.constant 0 : i32
    %c0_i32_0 = arith.constant 0 : i32
    %c0_i32_1 = arith.constant 0 : i32
    return %c0_i32, %c0_i32_0 : i32, i32
  }
  func.func @transform_4(%arg0: i32) -> (i32, i32) {
    %c0_i32 = arith.constant 0 : i32
    %c0_i32_0 = arith.constant 0 : i32
    %c0_i32_1 = arith.constant 0 : i32
    return %c0_i32, %c0_i32_0 : i32, i32
  }
  func.func @transform_5(%arg0: i32) -> (i32, i32) {
    %c0_i32 = arith.constant 0 : i32
    %c0_i32_0 = arith.constant 0 : i32
    %c0_i32_1 = arith.constant 0 : i32
    return %c0_i32, %c0_i32_0 : i32, i32
  }
  func.func @transform_6(%arg0: i32) -> (i32, i32) {
    %c0_i32 = arith.constant 0 : i32
    %c0_i32_0 = arith.constant 0 : i32
    %c0_i32_1 = arith.constant 0 : i32
    return %c0_i32, %c0_i32_0 : i32, i32
  }
  func.func @transform_7(%arg0: i32) -> (i32, i32) {
    %c0_i32 = arith.constant 0 : i32
    %c0_i32_0 = arith.constant 0 : i32
    %c0_i32_1 = arith.constant 0 : i32
    return %c0_i32, %c0_i32_0 : i32, i32
  }
  func.func @transform_8(%arg0: i32) -> (i32, i32) {
    %c0_i32 = arith.constant 0 : i32
    %c0_i32_0 = arith.constant 0 : i32
    %c0_i32_1 = arith.constant 0 : i32
    return %c0_i32, %c0_i32_0 : i32, i32
  }
  func.func @transform_9(%arg0: i32) -> (i32, i32) {
    %c0_i32 = arith.constant 0 : i32
    %c0_i32_0 = arith.constant 0 : i32
    %c0_i32_1 = arith.constant 0 : i32
    return %c0_i32, %c0_i32_0 : i32, i32
  }
  func.func @transform_10(%arg0: i32) -> (i32, i32) {
    %c0_i32 = arith.constant 0 : i32
    %c0_i32_0 = arith.constant 0 : i32
    %c0_i32_1 = arith.constant 0 : i32
    return %c0_i32, %c0_i32_0 : i32, i32
  }
  func.func @transform_11(%arg0: i32) -> (i32, i32, i32) {
    %c0_i32 = arith.constant 0 : i32
    %c0_i32_0 = arith.constant 0 : i32
    %c0_i32_1 = arith.constant 0 : i32
    return %arg0, %c0_i32, %c0_i32_0 : i32, i32, i32
  }
}

</mosaic_0001>

<llo_original>
// kernel: tpu_custom_call.1
$region0: #{tpu_custom_call.1}
  #allocation0 [shape = 'u32[]', space=smem, size = 0x4, offset = 0x4, fixed_abs, tag = 'smem constant byte address 0x4 - core index']
  #allocation1 [shape = 'u32[144,128]{1,0:T(1,128)}', space=vmem, size = 0x12000, scoped, tag = 'internal scratch']
  #allocation2 [shape = 'f32[1,1]{1,0:T(1,128)S(1)}', space=vmem, size = 0x200, scoped, tag = 'scoped memory for tpu_custom_call.1']
  %s0 = inlined_call_operand.vmem [shape: f32[48,24], index: 0, kind: input, shape index: {}]
  %s1 = inlined_call_operand.vmem [shape: f32[48,8], index: 1, kind: input, shape index: {}]
  %s2 = inlined_call_operand.vmem [shape: f32[24,32], index: 2, kind: input, shape index: {}]
  %s3 = inlined_call_operand.vmem [shape: f32[8,32], index: 3, kind: input, shape index: {}]
  %s4 = inlined_call_operand.vmem [shape: f32[1,32], index: 4, kind: input, shape index: {}]
  %s5 = inlined_call_operand.vmem [shape: f32[32,32], index: 5, kind: input, shape index: {}]
  %s6 = inlined_call_operand.vmem [shape: f32[1,32], index: 6, kind: input, shape index: {}]
  %s7 = inlined_call_operand.vmem [shape: f32[32,32], index: 7, kind: input, shape index: {}]
  %s8 = inlined_call_operand.vmem [shape: f32[1,32], index: 8, kind: input, shape index: {}]
  %s9 = inlined_call_operand.vmem [shape: f32[1,32], index: 9, kind: input, shape index: {}]
  %s10 = inlined_call_operand.<no memory space> [shape: f32[1,1], index: 10, kind: input, shape index: {}]
  %s11 = inlined_call_operand.hbm [shape: f32[3,1,16], index: 11, kind: output, shape index: {}]
  %s12 = sld [smem:[#allocation0]]
  $region77: #{tpu_custom_call.1} parent=0
    _
  %s14 = ssub.s32 1, %s12
  %s15 = scalar_select 0, %s14, %s12
  %v16 = vstv %s10
  %17 = vst [vmem:[#allocation2] sm:$0x1] %v16
  $region1: #{tpu_custom_call.1} parent=0
    #allocation3 [shape = 'u8[1024]{0}', space=vmem, size = 0x400, scoped, tag = 'output window, operand 0']
    #allocation4 [shape = 's32[2]{0}', space=sflag, size = 0x8, scoped, tag = 'scoped memory for tpu_custom_call.1']
    %18 = vsyncpa [#allocation4], 0
    %s19 = scalar_lea.sflag [#allocation4], 1
    %20 = vsyncpa %s19, 0
    loop: start=0, step=1, limit=5
    $region2: #{tpu_custom_call.1} parent=1 // loop_pre_header
      _
    $region3: #{tpu_custom_call.1} parent=1 // loop_header
      %s22 = sphi 0, %s26
      %p23 = scmp.ge.s32.totalorder %s22, 5
      %s32 = sphi 0, %s34
      %s35 = sphi 0, %s32
      %s36 = sphi 0, %s35
      %s52 = sphi 0, %s36
      %s58 = sphi 0, %s60
      %s61 = sphi 0, %s58
      %s62 = sphi 0, %s61
      %s78 = sphi 0, %s62
      %s82 = sphi 0, %s82
      %s84 = sphi 0, %s82
      %s85 = sphi 0, %s84
      %s99 = sphi 0, %s85
      %s103 = sphi 0, %s103
      %s105 = sphi 0, %s103
      %s106 = sphi 0, %s105
      %s120 = sphi 0, %s106
      %s124 = sphi 0, %s124
      %s126 = sphi 0, %s124
      %s127 = sphi 0, %s126
      %s141 = sphi 0, %s127
      %s145 = sphi 0, %s145
      %s147 = sphi 0, %s145
      %s148 = sphi 0, %s147
      %s162 = sphi 0, %s148
      %s166 = sphi 0, %s166
      %s168 = sphi 0, %s166
      %s169 = sphi 0, %s168
      %s183 = sphi 0, %s169
      %s187 = sphi 0, %s187
      %s189 = sphi 0, %s187
      %s190 = sphi 0, %s189
      %s204 = sphi 0, %s190
      %s208 = sphi 0, %s208
      %s210 = sphi 0, %s208
      %s211 = sphi 0, %s210
      %s225 = sphi 0, %s211
      %s229 = sphi 0, %s229
      %s231 = sphi 0, %s229
      %s232 = sphi 0, %s231
      %s246 = sphi 0, %s232
      %s250 = sphi 0, %s250
      %s252 = sphi 0, %s250
      %s253 = sphi 0, %s252
      %s267 = sphi 0, %s253
      %s273 = sphi 0, %s275
      %s276 = sphi 0, %s273
      %s277 = sphi 0, %s276
      %s293 = sphi 0, %s277
    $region4: #{tpu_custom_call.1} parent=1 // loop_header_branch
      %25 = sbr.rel (%p23) target = $region8
    $region5: #{tpu_custom_call.1} parent=1 // loop_body
      %s27 = ssub.s32 %s22, 1
      %s28 = ssub.s32 %s22, 2
      %s29 = sadd.s32 %s22, 1
      %s30 = ssub.s32 %s22, %s29
      %p31 = scmp.eq.s32.totalorder %s30, 0
      %s33 = sadd.s32 %s32, 1
      %s34 = scalar_select %p31, %s32, %s33
      %p37 = pneg %p31
      %p38 = scmp.eq.s32.totalorder %s22, 2
      %p39 = por %p37, %p38
      %p40 = scmp.ne.s32.totalorder %s32, %s35
      %p41 = scmp.eq.s32.totalorder %s22, 0
      %p42 = por %p40, %p41
      %p43 = scmp.ne.s32.totalorder %s32, %s35
      %p44 = scmp.eq.s32.totalorder %s27, 2
      %p45 = por %p43, %p44
      %p46 = scmp.ne.s32.totalorder %s35, %s36
      %p47 = scmp.eq.s32.totalorder %s27, 0
      %p48 = por %p46, %p47
      %p49 = scmp.ne.s32.totalorder %s35, %s36
      %p50 = scmp.eq.s32.totalorder %s28, 2
      %p51 = por %p49, %p50
      %p53 = scmp.ne.s32.totalorder %s36, %s52
      %p54 = scmp.eq.s32.totalorder %s28, 0
      %p55 = por %p53, %p54
      %s56 = ssub.s32 %s22, %s29
      %p57 = scmp.eq.s32.totalorder %s56, 0
      %s59 = sadd.s32 %s58, 1
      %s60 = scalar_select %p57, %s58, %s59
      %p63 = pneg %p57
      %p64 = scmp.eq.s32.totalorder %s22, 2
      %p65 = por %p63, %p64
      %p66 = scmp.ne.s32.totalorder %s58, %s61
      %p67 = scmp.eq.s32.totalorder %s22, 0
      %p68 = por %p66, %p67
      %p69 = scmp.ne.s32.totalorder %s58, %s61
      %p70 = scmp.eq.s32.totalorder %s27, 2
      %p71 = por %p69, %p70
      %p72 = scmp.ne.s32.totalorder %s61, %s62
      %p73 = scmp.eq.s32.totalorder %s27, 0
      %p74 = por %p72, %p73
      %p75 = scmp.ne.s32.totalorder %s61, %s62
      %p76 = scmp.eq.s32.totalorder %s28, 2
      %p77 = por %p75, %p76
      %p79 = scmp.ne.s32.totalorder %s62, %s78
      %p80 = scmp.eq.s32.totalorder %s28, 0
      %p81 = por %p79, %p80
      %s83 = sadd.s32 %s82, 1
      %p86 = scmp.eq.s32.totalorder %s22, 2
      %p87 = scmp.ne.s32.totalorder %s82, %s84
      %p88 = scmp.eq.s32.totalorder %s22, 0
      %p89 = por %p87, %p88
      %p90 = scmp.ne.s32.totalorder %s82, %s84
      %p91 = scmp.eq.s32.totalorder %s27, 2
      %p92 = por %p90, %p91
      %p93 = scmp.ne.s32.totalorder %s84, %s85
      %p94 = scmp.eq.s32.totalorder %s27, 0
      %p95 = por %p93, %p94
      %p96 = scmp.ne.s32.totalorder %s84, %s85
      %p97 = scmp.eq.s32.totalorder %s28, 2
      %p98 = por %p96, %p97
      %p100 = scmp.ne.s32.totalorder %s85, %s99
      %p101 = scmp.eq.s32.totalorder %s28, 0
      %p102 = por %p100, %p101
      %s104 = sadd.s32 %s103, 1
      %p107 = scmp.eq.s32.totalorder %s22, 2
      %p108 = scmp.ne.s32.totalorder %s103, %s105
      %p109 = scmp.eq.s32.totalorder %s22, 0
      %p110 = por %p108, %p109
      %p111 = scmp.ne.s32.totalorder %s103, %s105
      %p112 = scmp.eq.s32.totalorder %s27, 2
      %p113 = por %p111, %p112
      %p114 = scmp.ne.s32.totalorder %s105, %s106
      %p115 = scmp.eq.s32.totalorder %s27, 0
      %p116 = por %p114, %p115
      %p117 = scmp.ne.s32.totalorder %s105, %s106
      %p118 = scmp.eq.s32.totalorder %s28, 2
      %p119 = por %p117, %p118
      %p121 = scmp.ne.s32.totalorder %s106, %s120
      %p122 = scmp.eq.s32.totalorder %s28, 0
      %p123 = por %p121, %p122
      %s125 = sadd.s32 %s124, 1
      %p128 = scmp.eq.s32.totalorder %s22, 2
      %p129 = scmp.ne.s32.totalorder %s124, %s126
      %p130 = scmp.eq.s32.totalorder %s22, 0
      %p131 = por %p129, %p130
      %p132 = scmp.ne.s32.totalorder %s124, %s126
      %p133 = scmp.eq.s32.totalorder %s27, 2
      %p134 = por %p132, %p133
      %p135 = scmp.ne.s32.totalorder %s126, %s127
      %p136 = scmp.eq.s32.totalorder %s27, 0
      %p137 = por %p135, %p136
      %p138 = scmp.ne.s32.totalorder %s126, %s127
      %p139 = scmp.eq.s32.totalorder %s28, 2
      %p140 = por %p138, %p139
      %p142 = scmp.ne.s32.totalorder %s127, %s141
      %p143 = scmp.eq.s32.totalorder %s28, 0
      %p144 = por %p142, %p143
      %s146 = sadd.s32 %s145, 1
      %p149 = scmp.eq.s32.totalorder %s22, 2
      %p150 = scmp.ne.s32.totalorder %s145, %s147
      %p151 = scmp.eq.s32.totalorder %s22, 0
      %p152 = por %p150, %p151
      %p153 = scmp.ne.s32.totalorder %s145, %s147
      %p154 = scmp.eq.s32.totalorder %s27, 2
      %p155 = por %p153, %p154
      %p156 = scmp.ne.s32.totalorder %s147, %s148
      %p157 = scmp.eq.s32.totalorder %s27, 0
      %p158 = por %p156, %p157
      %p159 = scmp.ne.s32.totalorder %s147, %s148
      %p160 = scmp.eq.s32.totalorder %s28, 2
      %p161 = por %p159, %p160
      %p163 = scmp.ne.s32.totalorder %s148, %s162
      %p164 = scmp.eq.s32.totalorder %s28, 0
      %p165 = por %p163, %p164
      %s167 = sadd.s32 %s166, 1
      %p170 = scmp.eq.s32.totalorder %s22, 2
      %p171 = scmp.ne.s32.totalorder %s166, %s168
      %p172 = scmp.eq.s32.totalorder %s22, 0
      %p173 = por %p171, %p172
      %p174 = scmp.ne.s32.totalorder %s166, %s168
      %p175 = scmp.eq.s32.totalorder %s27, 2
      %p176 = por %p174, %p175
      %p177 = scmp.ne.s32.totalorder %s168, %s169
      %p178 = scmp.eq.s32.totalorder %s27, 0
      %p179 = por %p177, %p178
      %p180 = scmp.ne.s32.totalorder %s168, %s169
      %p181 = scmp.eq.s32.totalorder %s28, 2
      %p182 = por %p180, %p181
      %p184 = scmp.ne.s32.totalorder %s169, %s183
      %p185 = scmp.eq.s32.totalorder %s28, 0
      %p186 = por %p184, %p185
      %s188 = sadd.s32 %s187, 1
      %p191 = scmp.eq.s32.totalorder %s22, 2
      %p192 = scmp.ne.s32.totalorder %s187, %s189
      %p193 = scmp.eq.s32.totalorder %s22, 0
      %p194 = por %p192, %p193
      %p195 = scmp.ne.s32.totalorder %s187, %s189
      %p196 = scmp.eq.s32.totalorder %s27, 2
      %p197 = por %p195, %p196
      %p198 = scmp.ne.s32.totalorder %s189, %s190
      %p199 = scmp.eq.s32.totalorder %s27, 0
      %p200 = por %p198, %p199
      %p201 = scmp.ne.s32.totalorder %s189, %s190
      %p202 = scmp.eq.s32.totalorder %s28, 2
      %p203 = por %p201, %p202
      %p205 = scmp.ne.s32.totalorder %s190, %s204
      %p206 = scmp.eq.s32.totalorder %s28, 0
      %p207 = por %p205, %p206
      %s209 = sadd.s32 %s208, 1
      %p212 = scmp.eq.s32.totalorder %s22, 2
      %p213 = scmp.ne.s32.totalorder %s208, %s210
      %p214 = scmp.eq.s32.totalorder %s22, 0
      %p215 = por %p213, %p214
      %p216 = scmp.ne.s32.totalorder %s208, %s210
      %p217 = scmp.eq.s32.totalorder %s27, 2
      %p218 = por %p216, %p217
      %p219 = scmp.ne.s32.totalorder %s210, %s211
      %p220 = scmp.eq.s32.totalorder %s27, 0
      %p221 = por %p219, %p220
      %p222 = scmp.ne.s32.totalorder %s210, %s211
      %p223 = scmp.eq.s32.totalorder %s28, 2
      %p224 = por %p222, %p223
      %p226 = scmp.ne.s32.totalorder %s211, %s225
      %p227 = scmp.eq.s32.totalorder %s28, 0
      %p228 = por %p226, %p227
      %s230 = sadd.s32 %s229, 1
      %p233 = scmp.eq.s32.totalorder %s22, 2
      %p234 = scmp.ne.s32.totalorder %s229, %s231
      %p235 = scmp.eq.s32.totalorder %s22, 0
      %p236 = por %p234, %p235
      %p237 = scmp.ne.s32.totalorder %s229, %s231
      %p238 = scmp.eq.s32.totalorder %s27, 2
      %p239 = por %p237, %p238
      %p240 = scmp.ne.s32.totalorder %s231, %s232
      %p241 = scmp.eq.s32.totalorder %s27, 0
      %p242 = por %p240, %p241
      %p243 = scmp.ne.s32.totalorder %s231, %s232
      %p244 = scmp.eq.s32.totalorder %s28, 2
      %p245 = por %p243, %p244
      %p247 = scmp.ne.s32.totalorder %s232, %s246
      %p248 = scmp.eq.s32.totalorder %s28, 0
      %p249 = por %p247, %p248
      %s251 = sadd.s32 %s250, 1
      %p254 = scmp.eq.s32.totalorder %s22, 2
      %p255 = scmp.ne.s32.totalorder %s250, %s252
      %p256 = scmp.eq.s32.totalorder %s22, 0
      %p257 = por %p255, %p256
      %p258 = scmp.ne.s32.totalorder %s250, %s252
      %p259 = scmp.eq.s32.totalorder %s27, 2
      %p260 = por %p258, %p259
      %p261 = scmp.ne.s32.totalorder %s252, %s253
      %p262 = scmp.eq.s32.totalorder %s27, 0
      %p263 = por %p261, %p262
      %p264 = scmp.ne.s32.totalorder %s252, %s253
      %p265 = scmp.eq.s32.totalorder %s28, 2
      %p266 = por %p264, %p265
      %p268 = scmp.ne.s32.totalorder %s253, %s267
      %p269 = scmp.eq.s32.totalorder %s28, 0
      %p270 = por %p268, %p269
      %s271 = ssub.s32 %s22, %s29
      %p272 = scmp.eq.s32.totalorder %s271, 0
      %s274 = sadd.s32 %s273, 1
      %s275 = scalar_select %p272, %s273, %s274
      %p278 = pneg %p272
      %p279 = scmp.eq.s32.totalorder %s22, 2
      %p280 = por %p278, %p279
      %p281 = scmp.ne.s32.totalorder %s273, %s276
      %p282 = scmp.eq.s32.totalorder %s22, 0
      %p283 = por %p281, %p282
      %p284 = scmp.ne.s32.totalorder %s273, %s276
      %p285 = scmp.eq.s32.totalorder %s27, 2
      %p286 = por %p284, %p285
      %p287 = scmp.ne.s32.totalorder %s276, %s277
      %p288 = scmp.eq.s32.totalorder %s27, 0
      %p289 = por %p287, %p288
      %p290 = scmp.ne.s32.totalorder %s276, %s277
      %p291 = scmp.eq.s32.totalorder %s28, 2
      %p292 = por %p290, %p291
      %p294 = scmp.ne.s32.totalorder %s277, %s293
      %p295 = scmp.eq.s32.totalorder %s28, 0
      %p296 = por %p294, %p295
      %p297 = scmp.le.s32.totalorder 1, %s22
      %p298 = scmp.lt.s32.totalorder %s22, 4
      %p299 = pnand %p297, %p298
      %p300 = pneg %p299
      // Predicated region
      $region9: #{tpu_custom_call.1} parent=5 // pred_check
        _
      $region10: #{tpu_custom_call.1} parent=5 // pred_check_branch
        %302 = sbr.rel (%p299) target = $region12
      $region11: #{tpu_custom_call.1} parent=5 // pred_region
        %s303 = ssub.s32 %s22, 1
        // Predicated region
        $region13: #{tpu_custom_call.1} parent=11 // pred_check
          %p304 = pneg %p95
        $region14: #{tpu_custom_call.1} parent=11 // pred_check_branch
          %306 = sbr.rel (%p304) target = $region16
        $region15: #{tpu_custom_call.1} parent=11 // pred_region
          _
        $region16: #{tpu_custom_call.1} parent=11 // pred_fallthru
          _
        // Predicated region
        $region17: #{tpu_custom_call.1} parent=11 // pred_check
          %p307 = pneg %p116
        $region18: #{tpu_custom_call.1} parent=11 // pred_check_branch
          %309 = sbr.rel (%p307) target = $region20
        $region19: #{tpu_custom_call.1} parent=11 // pred_region
          _
        $region20: #{tpu_custom_call.1} parent=11 // pred_fallthru
          _
        // Predicated region
        $region21: #{tpu_custom_call.1} parent=11 // pred_check
          %p310 = pneg %p137
        $region22: #{tpu_custom_call.1} parent=11 // pred_check_branch
          %312 = sbr.rel (%p310) target = $region24
        $region23: #{tpu_custom_call.1} parent=11 // pred_region
          _
        $region24: #{tpu_custom_call.1} parent=11 // pred_fallthru
          _
        // Predicated region
        $region25: #{tpu_custom_call.1} parent=11 // pred_check
          %p313 = pneg %p158
        $region26: #{tpu_custom_call.1} parent=11 // pred_check_branch
          %315 = sbr.rel (%p313) target = $region28
        $region27: #{tpu_custom_call.1} parent=11 // pred_region
          _
        $region28: #{tpu_custom_call.1} parent=11 // pred_fallthru
          _
        // Predicated region
        $region29: #{tpu_custom_call.1} parent=11 // pred_check
          %p316 = pneg %p179
        $region30: #{tpu_custom_call.1} parent=11 // pred_check_branch
          %318 = sbr.rel (%p316) target = $region32
        $region31: #{tpu_custom_call.1} parent=11 // pred_region
          _
        $region32: #{tpu_custom_call.1} parent=11 // pred_fallthru
          _
        // Predicated region
        $region33: #{tpu_custom_call.1} parent=11 // pred_check
          %p319 = pneg %p200
        $region34: #{tpu_custom_call.1} parent=11 // pred_check_branch
          %321 = sbr.rel (%p319) target = $region36
        $region35: #{tpu_custom_call.1} parent=11 // pred_region
          _
        $region36: #{tpu_custom_call.1} parent=11 // pred_fallthru
          _
        // Predicated region
        $region37: #{tpu_custom_call.1} parent=11 // pred_check
          %p322 = pneg %p221
        $region38: #{tpu_custom_call.1} parent=11 // pred_check_branch
          %324 = sbr.rel (%p322) target = $region40
        $region39: #{tpu_custom_call.1} parent=11 // pred_region
          _
        $region40: #{tpu_custom_call.1} parent=11 // pred_fallthru
          _
        // Predicated region
        $region41: #{tpu_custom_call.1} parent=11 // pred_check
          %p325 = pneg %p242
        $region42: #{tpu_custom_call.1} parent=11 // pred_check_branch
          %327 = sbr.rel (%p325) target = $region44
        $region43: #{tpu_custom_call.1} parent=11 // pred_region
          _
        $region44: #{tpu_custom_call.1} parent=11 // pred_fallthru
          _
        // Predicated region
        $region45: #{tpu_custom_call.1} parent=11 // pred_check
          %p328 = pneg %p263
        $region46: #{tpu_custom_call.1} parent=11 // pred_check_branch
          %330 = sbr.rel (%p328) target = $region48
        $region47: #{tpu_custom_call.1} parent=11 // pred_region
          _
        $region48: #{tpu_custom_call.1} parent=11 // pred_fallthru
          _
      $region12: #{tpu_custom_call.1} parent=5 // pred_fallthru
        _
      %p331 = scmp.lt.s32.totalorder %s22, 3
      // Predicated region
      $region49: #{tpu_custom_call.1} parent=5 // pred_check
        %p332 = pneg %p331
      $region50: #{tpu_custom_call.1} parent=5 // pred_check_branch
        %334 = sbr.rel (%p332) target = $region52
      $region51: #{tpu_custom_call.1} parent=5 // pred_region
        // Predicated region
        $region53: #{tpu_custom_call.1} parent=51 // pred_check
          %p335 = pneg %p42
        $region54: #{tpu_custom_call.1} parent=51 // pred_check_branch
          %337 = sbr.rel (%p335) target = $region56
        $region55: #{tpu_custom_call.1} parent=51 // pred_region
          %s338 = smul.u32 2, %s22
          %p339 = scmp.lt.s32.totalorder %s338, 5
          %s340 = scalar_select %p339, %s338, 5
          %s341 = smul.addr %s340, 8
          %s342 = scalar_lea.vmem %s0, %s341
          %s343 = smul.u32 2, %s22
        $region56: #{tpu_custom_call.1} parent=51 // pred_fallthru
          _
        // Predicated region
        $region57: #{tpu_custom_call.1} parent=51 // pred_check
          %p344 = pneg %p68
        $region58: #{tpu_custom_call.1} parent=51 // pred_check_branch
          %346 = sbr.rel (%p344) target = $region60
        $region59: #{tpu_custom_call.1} parent=51 // pred_region
          %s347 = smul.u32 2, %s22
          %p348 = scmp.lt.s32.totalorder %s347, 5
          %s349 = scalar_select %p348, %s347, 5
          %s350 = smul.addr %s349, 8
          %s351 = scalar_lea.vmem %s1, %s350
          %s352 = smul.u32 2, %s22
        $region60: #{tpu_custom_call.1} parent=51 // pred_fallthru
          _
      $region52: #{tpu_custom_call.1} parent=5 // pred_fallthru
        _
      %p353 = scmp.le.s32.totalorder 1, %s22
      %p354 = scmp.lt.s32.totalorder %s22, 4
      %p355 = pnand %p353, %p354
      %p356 = pneg %p355
      // Predicated region
      $region61: #{tpu_custom_call.1} parent=5 // pred_check
        _
      $region62: #{tpu_custom_call.1} parent=5 // pred_check_branch
        %358 = sbr.rel (%p355) target = $region64
      $region63: #{tpu_custom_call.1} parent=5 // pred_region
        %s359 = ssub.s32 %s22, 1
        %s360 = smul.u32 2, %s27
        %p361 = scmp.lt.s32.totalorder %s360, 5
        %s362 = scalar_select %p361, %s360, 5
        %s363 = smul.addr %s362, 8
        %s364 = scalar_lea.vmem %s0, %s363
        %p365 = pneg %p48
        %p366 = pneg %p45
        %s367 = smul.u32 2, %s27
        %p368 = scmp.lt.s32.totalorder %s367, 5
        %s369 = scalar_select %p368, %s367, 5
        %s370 = smul.addr %s369, 8
        %s371 = scalar_lea.vmem %s1, %s370
        %p372 = pneg %p74
        %p373 = pneg %p71
        %p374 = pneg %p95
        %p375 = pneg %p92
        %p376 = pneg %p116
        %p377 = pneg %p113
        %p378 = pneg %p137
        %p379 = pneg %p134
        %p380 = pneg %p158
        %p381 = pneg %p155
        %p382 = pneg %p179
        %p383 = pneg %p176
        %p384 = pneg %p200
        %p385 = pneg %p197
        %p386 = pneg %p221
        %p387 = pneg %p218
        %p388 = pneg %p242
        %p389 = pneg %p239
        %p390 = pneg %p263
        %p391 = pneg %p260
        %p392 = pneg %p289
        %p393 = pneg %p286
        %s394 = sand.u32 %s276, 1
        %s395 = scalar_lea.sflag [#allocation4], %s394
        %s396 = sand.u32 %s276, 1
        %s397 = scalar_lea.vmem [#allocation3], %s396
        %s398 = smul.u32 2, %s27
        %p399 = scmp.lt.s32.totalorder %s398, 5
        %s400 = scalar_select %p399, %s398, 5
        %s401 = smul.addr %s400, 8
        %s402 = scalar_lea.vmem %s0, %s401
        %s403 = smul.u32 2, %s27
        %s404 = smul.u32 2, %s27
        %p405 = scmp.lt.s32.totalorder %s404, 5
        %s406 = scalar_select %p405, %s404, 5
        %s407 = smul.addr %s406, 8
        %s408 = scalar_lea.vmem %s1, %s407
        %s409 = smul.u32 2, %s27
        %v410 = vld [vmem:[%s402] sm:$0xff]
        %v411 = vld [vmem:[%s402 + $0x8] sm:$0xff]
        %v412 = vld [vmem:[%s2] sm:$0xff]
        %v413 = vld [vmem:[%s2 + $0x8] sm:$0xff]
        %v414 = vld [vmem:[%s2 + $0x10] sm:$0xff]
        %v415 = vld [vmem:[%s408] sm:$0xff]
        %v416 = vld [vmem:[%s408 + $0x8] sm:$0xff]
        %v417 = vld [vmem:[%s3] sm:$0xff]
        %vm418 = vcmask 64512
        %v420 = vsel %vm418, %v415, 0
        %v423 = vsel %vm418, %v416, 0
        %425 = vmatprep.subr.mxu0 0.0
        %426 = vmatpush1.msra.mxu0 %v417
        %427 = vmatprep.subr.mxu0 0.0
        %428 = vmatpush1.msra.mxu0 0.0
        %429 = vmatprep.subr.mxu0 0.0
        %430 = vmatpush1.msra.mxu0 0.0
        %431 = vmatprep.subr.mxu0 0.0
        %432 = vmatpush1.msra.mxu0 0.0
        %433 = vmatprep.subr.mxu0 0.0
        %434 = vmatpush1.msra.mxu0 0.0
        %435 = vmatprep.subr.mxu0 0.0
        %436 = vmatpush1.msra.mxu0 0.0
        %437 = vmatprep.subr.mxu0 0.0
        %438 = vmatpush1.msra.mxu0 0.0
        %439 = vmatprep.subr.mxu0 0.0
        %440 = vmatpush1.msra.mxu0 0.0
        %441 = vmatprep.subr.mxu0 0.0
        %442 = vmatpush1.msra.mxu0 0.0
        %443 = vmatprep.subr.mxu0 0.0
        %444 = vmatpush1.msra.mxu0 0.0
        %445 = vmatprep.subr.mxu0 0.0
        %446 = vmatpush1.msra.mxu0 0.0
        %447 = vmatprep.subr.mxu0 0.0
        %448 = vmatpush1.msra.mxu0 0.0
        %449 = vmatprep.subr.mxu0 0.0
        %450 = vmatpush1.msra.mxu0 0.0
        %451 = vmatprep.subr.mxu0 0.0
        %452 = vmatpush1.msra.mxu0 0.0
        %453 = vmatprep.subr.mxu0 0.0
        %454 = vmatpush1.msra.mxu0 0.0
        %455 = vmatprep.subr.mxu0 0.0
        %456 = vmatpush1.msra.mxu0 0.0
        %457 = vmatprep.subr.mxu0 0.0
        %458 = vmatpush1.msra.mxu0 0.0
        %459 = vmatprep.subr.mxu0 0.0
        %460 = vmatpush1.msra.mxu0 0.0
        %461 = vmatprep.subr.mxu0 0.0
        %462 = vmatpush1.msra.mxu0 0.0
        %463 = vmatprep.subr.mxu0 0.0
        %464 = vmatpush1.msra.mxu0 0.0
        %465 = vmatprep.subr.mxu0 0.0
        %466 = vmatpush1.msra.mxu0 0.0
        %467 = vmatprep.subr.mxu0 0.0
        %468 = vmatpush1.msra.mxu0 0.0
        %469 = vmatprep.subr.mxu0 0.0
        %470 = vmatpush1.msra.mxu0 0.0
        %471 = vmatprep.subr.mxu0 0.0
        %472 = vmatpush1.msra.mxu0 0.0
        %473 = vmatprep.subr.mxu0 0.0
        %474 = vmatpush1.msra.mxu0 0.0
        %475 = vmatprep.subr.mxu0 0.0
        %476 = vmatpush1.msra.mxu0 0.0
        %477 = vmatprep.subr.mxu0 0.0
        %478 = vmatpush1.msra.mxu0 0.0
        %479 = vmatprep.subr.mxu0 0.0
        %480 = vmatpush1.msra.mxu0 0.0
        %481 = vmatprep.subr.mxu0 0.0
        %482 = vmatpush1.msra.mxu0 0.0
        %483 = vmatprep.subr.mxu0 0.0
        %484 = vmatpush1.msra.mxu0 0.0
        %485 = vmatprep.subr.mxu0 0.0
        %486 = vmatpush1.msra.mxu0 0.0
        %487 = vmatprep.subr.mxu0 0.0
        %488 = vmatpush1.msra.mxu0 0.0
        %489 = vmatprep.mubr.f32.mxu0 0.0
        %490 = vmatmul.mubr.f32.gmra.mrb[0].mxu0 %v420
        %v491 = vpop.f32.mrb[0].mxu0
        %v492 = vadd.f32 0.0, %v491
        %v493 = vpop.f32.mrb[0].mxu0
        %494 = vmatprep.mubr.f32.mxu0 0.0
        %495 = vmatmul.mubr.f32.gmra.mrb[0].mxu0 %v423
        %v496 = vpop.f32.mrb[0].mxu0
        %v497 = vadd.f32 0.0, %v496
        %v498 = vpop.f32.mrb[0].mxu0
        %499 = vdwg.mxu0
        %vm500 = vcmask 195584
        %v502 = vsel %vm500, %v410, 0
        %v505 = vsel %vm500, %v411, 0
        %507 = vmatprep.subr.mxu0 0.0
        %508 = vmatpush1.msra.mxu0 %v412
        %509 = vmatprep.subr.mxu0 0.0
        %510 = vmatpush1.msra.mxu0 %v413
        %511 = vmatprep.subr.mxu0 0.0
        %512 = vmatpush1.msra.mxu0 %v414
        %513 = vmatprep.subr.mxu0 0.0
        %514 = vmatpush1.msra.mxu0 0.0
        %515 = vmatprep.subr.mxu0 0.0
        %516 = vmatpush1.msra.mxu0 0.0
        %517 = vmatprep.subr.mxu0 0.0
        %518 = vmatpush1.msra.mxu0 0.0
        %519 = vmatprep.subr.mxu0 0.0
        %520 = vmatpush1.msra.mxu0 0.0
        %521 = vmatprep.subr.mxu0 0.0
        %522 = vmatpush1.msra.mxu0 0.0
        %523 = vmatprep.subr.mxu0 0.0
        %524 = vmatpush1.msra.mxu0 0.0
        %525 = vmatprep.subr.mxu0 0.0
        %526 = vmatpush1.msra.mxu0 0.0
        %527 = vmatprep.subr.mxu0 0.0
        %528 = vmatpush1.msra.mxu0 0.0
        %529 = vmatprep.subr.mxu0 0.0
        %530 = vmatpush1.msra.mxu0 0.0
        %531 = vmatprep.subr.mxu0 0.0
        %532 = vmatpush1.msra.mxu0 0.0
        %533 = vmatprep.subr.mxu0 0.0
        %534 = vmatpush1.msra.mxu0 0.0
        %535 = vmatprep.subr.mxu0 0.0
        %536 = vmatpush1.msra.mxu0 0.0
        %537 = vmatprep.subr.mxu0 0.0
        %538 = vmatpush1.msra.mxu0 0.0
        %539 = vmatprep.subr.mxu0 0.0
        %540 = vmatpush1.msra.mxu0 0.0
        %541 = vmatprep.subr.mxu0 0.0
        %542 = vmatpush1.msra.mxu0 0.0
        %543 = vmatprep.subr.mxu0 0.0
        %544 = vmatpush1.msra.mxu0 0.0
        %545 = vmatprep.subr.mxu0 0.0
        %546 = vmatpush1.msra.mxu0 0.0
        %547 = vmatprep.subr.mxu0 0.0
        %548 = vmatpush1.msra.mxu0 0.0
        %549 = vmatprep.subr.mxu0 0.0
        %550 = vmatpush1.msra.mxu0 0.0
        %551 = vmatprep.subr.mxu0 0.0
        %552 = vmatpush1.msra.mxu0 0.0
        %553 = vmatprep.subr.mxu0 0.0
        %554 = vmatpush1.msra.mxu0 0.0
        %555 = vmatprep.subr.mxu0 0.0
        %556 = vmatpush1.msra.mxu0 0.0
        %557 = vmatprep.subr.mxu0 0.0
        %558 = vmatpush1.msra.mxu0 0.0
        %559 = vmatprep.subr.mxu0 0.0
        %560 = vmatpush1.msra.mxu0 0.0
        %561 = vmatprep.subr.mxu0 0.0
        %562 = vmatpush1.msra.mxu0 0.0
        %563 = vmatprep.subr.mxu0 0.0
        %564 = vmatpush1.msra.mxu0 0.0
        %565 = vmatprep.subr.mxu0 0.0
        %566 = vmatpush1.msra.mxu0 0.0
        %567 = vmatprep.subr.mxu0 0.0
        %568 = vmatpush1.msra.mxu0 0.0
        %569 = vmatprep.subr.mxu0 0.0
        %570 = vmatpush1.msra.mxu0 0.0
        %571 = vmatprep.mubr.f32.mxu0 0.0
        %572 = vmatmul.mubr.f32.gmra.mrb[0].mxu0 %v502
        %v573 = vpop.f32.mrb[0].mxu0
        %v574 = vadd.f32 %v492, %v573
        %v575 = vpop.f32.mrb[0].mxu0
        %576 = vmatprep.mubr.f32.mxu0 0.0
        %577 = vmatmul.mubr.f32.gmra.mrb[0].mxu0 %v505
        %v578 = vpop.f32.mrb[0].mxu0
        %v579 = vadd.f32 %v497, %v578
        %v580 = vpop.f32.mrb[0].mxu0
        %581 = vdwg.mxu0
        %v582 = vld [vmem:[%s4] sm:$0x1]
        %v584 = vlaneseq
        %v585 = vshrl.u32 %v584, 7
        %v586 = vsub.s32 0, %v585
        %v587 = vrot.slane %v582, %v586
        %v589 = vadd.f32 %v574, %v587
        %v590 = vadd.f32 %v579, %v587
        %vm591 = vcmp.gt.f32.partialorder %v589, 0.0
        %vm592 = vcmp.gt.f32.partialorder %v590, 0.0
        %v593 = vmin.f32 %v589, 0.0
        %v594 = vmin.f32 %v590, 0.0
        %v595 = vmul.f32 %v593, 1.442695
        %v596 = vpow.pop %v595
        %v597 = vmul.f32 %v594, 1.442695
        %v598 = vpow.pop %v597
        %v599 = vsub.f32 %v596, 1.0
        %v600 = vsub.f32 %v598, 1.0
        %v601 = vsel %vm591, %v589, %v599
        %v602 = vsel %vm592, %v590, %v600
        %v603 = vld [vmem:[%s5] sm:$0xff]
        %v604 = vld [vmem:[%s5 + $0x8] sm:$0xff]
        %v605 = vld [vmem:[%s5 + $0x10] sm:$0xff]
        %v606 = vld [vmem:[%s5 + $0x18] sm:$0xff]
        %v607 = vld [vmem:[%s6] sm:$0x1]
        %v609 = vlaneseq
        %v610 = vshrl.u32 %v609, 7
        %v611 = vsub.s32 0, %v610
        %v612 = vrot.slane %v607, %v611
        %vm614 = vcmask 261120
        %v616 = vsel %vm614, %v601, 0
        %v619 = vsel %vm614, %v602, 0
        %621 = vmatprep.subr.mxu0 0.0
        %622 = vmatpush1.msra.mxu0 %v603
        %623 = vmatprep.subr.mxu0 0.0
        %624 = vmatpush1.msra.mxu0 %v604
        %625 = vmatprep.subr.mxu0 0.0
        %626 = vmatpush1.msra.mxu0 %v605
        %627 = vmatprep.subr.mxu0 0.0
        %628 = vmatpush1.msra.mxu0 %v606
        %629 = vmatprep.subr.mxu0 0.0
        %630 = vmatpush1.msra.mxu0 0.0
        %631 = vmatprep.subr.mxu0 0.0
        %632 = vmatpush1.msra.mxu0 0.0
        %633 = vmatprep.subr.mxu0 0.0
        %634 = vmatpush1.msra.mxu0 0.0
        %635 = vmatprep.subr.mxu0 0.0
        %636 = vmatpush1.msra.mxu0 0.0
        %637 = vmatprep.subr.mxu0 0.0
        %638 = vmatpush1.msra.mxu0 0.0
        %639 = vmatprep.subr.mxu0 0.0
        %640 = vmatpush1.msra.mxu0 0.0
        %641 = vmatprep.subr.mxu0 0.0
        %642 = vmatpush1.msra.mxu0 0.0
        %643 = vmatprep.subr.mxu0 0.0
        %644 = vmatpush1.msra.mxu0 0.0
        %645 = vmatprep.subr.mxu0 0.0
        %646 = vmatpush1.msra.mxu0 0.0
        %647 = vmatprep.subr.mxu0 0.0
        %648 = vmatpush1.msra.mxu0 0.0
        %649 = vmatprep.subr.mxu0 0.0
        %650 = vmatpush1.msra.mxu0 0.0
        %651 = vmatprep.subr.mxu0 0.0
        %652 = vmatpush1.msra.mxu0 0.0
        %653 = vmatprep.subr.mxu0 0.0
        %654 = vmatpush1.msra.mxu0 0.0
        %655 = vmatprep.subr.mxu0 0.0
        %656 = vmatpush1.msra.mxu0 0.0
        %657 = vmatprep.subr.mxu0 0.0
        %658 = vmatpush1.msra.mxu0 0.0
        %659 = vmatprep.subr.mxu0 0.0
        %660 = vmatpush1.msra.mxu0 0.0
        %661 = vmatprep.subr.mxu0 0.0
        %662 = vmatpush1.msra.mxu0 0.0
        %663 = vmatprep.subr.mxu0 0.0
        %664 = vmatpush1.msra.mxu0 0.0
        %665 = vmatprep.subr.mxu0 0.0
        %666 = vmatpush1.msra.mxu0 0.0
        %667 = vmatprep.subr.mxu0 0.0
        %668 = vmatpush1.msra.mxu0 0.0
        %669 = vmatprep.subr.mxu0 0.0
        %670 = vmatpush1.msra.mxu0 0.0
        %671 = vmatprep.subr.mxu0 0.0
        %672 = vmatpush1.msra.mxu0 0.0
        %673 = vmatprep.subr.mxu0 0.0
        %674 = vmatpush1.msra.mxu0 0.0
        %675 = vmatprep.subr.mxu0 0.0
        %676 = vmatpush1.msra.mxu0 0.0
        %677 = vmatprep.subr.mxu0 0.0
        %678 = vmatpush1.msra.mxu0 0.0
        %679 = vmatprep.subr.mxu0 0.0
        %680 = vmatpush1.msra.mxu0 0.0
        %681 = vmatprep.subr.mxu0 0.0
        %682 = vmatpush1.msra.mxu0 0.0
        %683 = vmatprep.subr.mxu0 0.0
        %684 = vmatpush1.msra.mxu0 0.0
        %685 = vmatprep.mubr.f32.mxu0 0.0
        %686 = vmatmul.mubr.f32.gmra.mrb[0].mxu0 %v616
        %v687 = vpop.f32.mrb[0].mxu0
        %v688 = vadd.f32 %v612, %v687
        %v689 = vpop.f32.mrb[0].mxu0
        %690 = vmatprep.mubr.f32.mxu0 0.0
        %691 = vmatmul.mubr.f32.gmra.mrb[0].mxu0 %v619
        %v692 = vpop.f32.mrb[0].mxu0
        %v693 = vadd.f32 %v612, %v692
        %v694 = vpop.f32.mrb[0].mxu0
        %695 = vdwg.mxu0
        %vm696 = vcmp.gt.f32.partialorder %v688, 0.0
        %vm697 = vcmp.gt.f32.partialorder %v693, 0.0
        %v698 = vmin.f32 %v688, 0.0
        %v699 = vmin.f32 %v693, 0.0
        %v700 = vmul.f32 %v698, 1.442695
        %v701 = vpow.pop %v700
        %v702 = vmul.f32 %v699, 1.442695
        %v703 = vpow.pop %v702
        %v704 = vsub.f32 %v701, 1.0
        %v705 = vsub.f32 %v703, 1.0
        %v706 = vsel %vm696, %v688, %v704
        %v707 = vsel %vm697, %v693, %v705
        %v708 = vld [vmem:[%s7] sm:$0xff]
        %v709 = vld [vmem:[%s7 + $0x8] sm:$0xff]
        %v710 = vld [vmem:[%s7 + $0x10] sm:$0xff]
        %v711 = vld [vmem:[%s7 + $0x18] sm:$0xff]
        %v712 = vld [vmem:[%s8] sm:$0x1]
        %v714 = vlaneseq
        %v715 = vshrl.u32 %v714, 7
        %v716 = vsub.s32 0, %v715
        %v717 = vrot.slane %v712, %v716
        %v720 = vsel %vm614, %v706, 0
        %v723 = vsel %vm614, %v707, 0
        %725 = vmatprep.subr.mxu0 0.0
        %726 = vmatpush1.msra.mxu0 %v708
        %727 = vmatprep.subr.mxu0 0.0
        %728 = vmatpush1.msra.mxu0 %v709
        %729 = vmatprep.subr.mxu0 0.0
        %730 = vmatpush1.msra.mxu0 %v710
        %731 = vmatprep.subr.mxu0 0.0
        %732 = vmatpush1.msra.mxu0 %v711
        %733 = vmatprep.subr.mxu0 0.0
        %734 = vmatpush1.msra.mxu0 0.0
        %735 = vmatprep.subr.mxu0 0.0
        %736 = vmatpush1.msra.mxu0 0.0
        %737 = vmatprep.subr.mxu0 0.0
        %738 = vmatpush1.msra.mxu0 0.0
        %739 = vmatprep.subr.mxu0 0.0
        %740 = vmatpush1.msra.mxu0 0.0
        %741 = vmatprep.subr.mxu0 0.0
        %742 = vmatpush1.msra.mxu0 0.0
        %743 = vmatprep.subr.mxu0 0.0
        %744 = vmatpush1.msra.mxu0 0.0
        %745 = vmatprep.subr.mxu0 0.0
        %746 = vmatpush1.msra.mxu0 0.0
        %747 = vmatprep.subr.mxu0 0.0
        %748 = vmatpush1.msra.mxu0 0.0
        %749 = vmatprep.subr.mxu0 0.0
        %750 = vmatpush1.msra.mxu0 0.0
        %751 = vmatprep.subr.mxu0 0.0
        %752 = vmatpush1.msra.mxu0 0.0
        %753 = vmatprep.subr.mxu0 0.0
        %754 = vmatpush1.msra.mxu0 0.0
        %755 = vmatprep.subr.mxu0 0.0
        %756 = vmatpush1.msra.mxu0 0.0
        %757 = vmatprep.subr.mxu0 0.0
        %758 = vmatpush1.msra.mxu0 0.0
        %759 = vmatprep.subr.mxu0 0.0
        %760 = vmatpush1.msra.mxu0 0.0
        %761 = vmatprep.subr.mxu0 0.0
        %762 = vmatpush1.msra.mxu0 0.0
        %763 = vmatprep.subr.mxu0 0.0
        %764 = vmatpush1.msra.mxu0 0.0
        %765 = vmatprep.subr.mxu0 0.0
        %766 = vmatpush1.msra.mxu0 0.0
        %767 = vmatprep.subr.mxu0 0.0
        %768 = vmatpush1.msra.mxu0 0.0
        %769 = vmatprep.subr.mxu0 0.0
        %770 = vmatpush1.msra.mxu0 0.0
        %771 = vmatprep.subr.mxu0 0.0
        %772 = vmatpush1.msra.mxu0 0.0
        %773 = vmatprep.subr.mxu0 0.0
        %774 = vmatpush1.msra.mxu0 0.0
        %775 = vmatprep.subr.mxu0 0.0
        %776 = vmatpush1.msra.mxu0 0.0
        %777 = vmatprep.subr.mxu0 0.0
        %778 = vmatpush1.msra.mxu0 0.0
        %779 = vmatprep.subr.mxu0 0.0
        %780 = vmatpush1.msra.mxu0 0.0
        %781 = vmatprep.subr.mxu0 0.0
        %782 = vmatpush1.msra.mxu0 0.0
        %783 = vmatprep.subr.mxu0 0.0
        %784 = vmatpush1.msra.mxu0 0.0
        %785 = vmatprep.subr.mxu0 0.0
        %786 = vmatpush1.msra.mxu0 0.0
        %787 = vmatprep.subr.mxu0 0.0
        %788 = vmatpush1.msra.mxu0 0.0
        %789 = vmatprep.mubr.f32.mxu0 0.0
        %790 = vmatmul.mubr.f32.gmra.mrb[0].mxu0 %v720
        %v791 = vpop.f32.mrb[0].mxu0
        %v792 = vadd.f32 %v717, %v791
        %v793 = vpop.f32.mrb[0].mxu0
        %794 = vmatprep.mubr.f32.mxu0 0.0
        %795 = vmatmul.mubr.f32.gmra.mrb[0].mxu0 %v723
        %v796 = vpop.f32.mrb[0].mxu0
        %v797 = vadd.f32 %v717, %v796
        %v798 = vpop.f32.mrb[0].mxu0
        %799 = vdwg.mxu0
        %vm800 = vcmp.gt.f32.partialorder %v792, 0.0
        %vm801 = vcmp.gt.f32.partialorder %v797, 0.0
        %v802 = vmin.f32 %v792, 0.0
        %v803 = vmin.f32 %v797, 0.0
        %v804 = vmul.f32 %v802, 1.442695
        %v805 = vpow.pop %v804
        %v806 = vmul.f32 %v803, 1.442695
        %v807 = vpow.pop %v806
        %v808 = vsub.f32 %v805, 1.0
        %v809 = vsub.f32 %v807, 1.0
        %v810 = vsel %vm800, %v792, %v808
        %v811 = vsel %vm801, %v797, %v809
        %v812 = vld [vmem:[%s9] sm:$0x1]
        %v813 = vld [vmem:[#allocation2] sm:$0x1]
        %815 = vset.pattern.permute.xlu0 0
        %816 = vperm.xlu0 %815, %v813
        %v817 = vpop.permute.xlu0 %816
        %v819 = vlaneseq
        %v820 = vshrl.u32 %v819, 7
        %v821 = vsub.s32 0, %v820
        %v822 = vrot.slane %v817, %v821
        %v824 = vsel %vm614, %v812, 0
        %v827 = vsel %vm614, %v810, 0
        %v830 = vsel %vm614, %v811, 0
        %832 = vmatprep.subr.mxu0 0.0
        %833 = vmatpush1.xpose.msra.mxu0 %v827
        %834 = vmatprep.subr.mxu0 0.0
        %835 = vmatpush1.xpose.msra.mxu0 %v830
        %836 = vmatprep.subr.mxu0 0.0
        %837 = vmatpush1.xpose.msra.mxu0 0.0
        %838 = vmatprep.subr.mxu0 0.0
        %839 = vmatpush1.xpose.msra.mxu0 0.0
        %840 = vmatprep.subr.mxu0 0.0
        %841 = vmatpush1.xpose.msra.mxu0 0.0
        %842 = vmatprep.subr.mxu0 0.0
        %843 = vmatpush1.xpose.msra.mxu0 0.0
        %844 = vmatprep.subr.mxu0 0.0
        %845 = vmatpush1.xpose.msra.mxu0 0.0
        %846 = vmatprep.subr.mxu0 0.0
        %847 = vmatpush1.xpose.msra.mxu0 0.0
        %848 = vmatprep.subr.mxu0 0.0
        %849 = vmatpush1.xpose.msra.mxu0 0.0
        %850 = vmatprep.subr.mxu0 0.0
        %851 = vmatpush1.xpose.msra.mxu0 0.0
        %852 = vmatprep.subr.mxu0 0.0
        %853 = vmatpush1.xpose.msra.mxu0 0.0
        %854 = vmatprep.subr.mxu0 0.0
        %855 = vmatpush1.xpose.msra.mxu0 0.0
        %856 = vmatprep.subr.mxu0 0.0
        %857 = vmatpush1.xpose.msra.mxu0 0.0
        %858 = vmatprep.subr.mxu0 0.0
        %859 = vmatpush1.xpose.msra.mxu0 0.0
        %860 = vmatprep.subr.mxu0 0.0
        %861 = vmatpush1.xpose.msra.mxu0 0.0
        %862 = vmatprep.subr.mxu0 0.0
        %863 = vmatpush1.xpose.msra.mxu0 0.0
        %864 = vmatprep.subr.mxu0 0.0
        %865 = vmatpush1.xpose.msra.mxu0 0.0
        %866 = vmatprep.subr.mxu0 0.0
        %867 = vmatpush1.xpose.msra.mxu0 0.0
        %868 = vmatprep.subr.mxu0 0.0
        %869 = vmatpush1.xpose.msra.mxu0 0.0
        %870 = vmatprep.subr.mxu0 0.0
        %871 = vmatpush1.xpose.msra.mxu0 0.0
        %872 = vmatprep.subr.mxu0 0.0
        %873 = vmatpush1.xpose.msra.mxu0 0.0
        %874 = vmatprep.subr.mxu0 0.0
        %875 = vmatpush1.xpose.msra.mxu0 0.0
        %876 = vmatprep.subr.mxu0 0.0
        %877 = vmatpush1.xpose.msra.mxu0 0.0
        %878 = vmatprep.subr.mxu0 0.0
        %879 = vmatpush1.xpose.msra.mxu0 0.0
        %880 = vmatprep.subr.mxu0 0.0
        %881 = vmatpush1.xpose.msra.mxu0 0.0
        %882 = vmatprep.subr.mxu0 0.0
        %883 = vmatpush1.xpose.msra.mxu0 0.0
        %884 = vmatprep.subr.mxu0 0.0
        %885 = vmatpush1.xpose.msra.mxu0 0.0
        %886 = vmatprep.subr.mxu0 0.0
        %887 = vmatpush1.xpose.msra.mxu0 0.0
        %888 = vmatprep.subr.mxu0 0.0
        %889 = vmatpush1.xpose.msra.mxu0 0.0
        %890 = vmatprep.subr.mxu0 0.0
        %891 = vmatpush1.xpose.msra.mxu0 0.0
        %892 = vmatprep.subr.mxu0 0.0
        %893 = vmatpush1.xpose.msra.mxu0 0.0
        %894 = vmatprep.subr.mxu0 0.0
        %895 = vmatpush1.xpose.msra.mxu0 0.0
        %896 = vmatprep.mubr.f32.mxu0 0.0
        %897 = vmatmul.mubr.f32.gmra.mrb[0].mxu0 %v824
        %v898 = vpop.f32.mrb[0].mxu0
        %v899 = vadd.f32 %v822, %v898
        %v900 = vpop.f32.mrb[0].mxu0
        %901 = vdwg.mxu0
        %vm902 = vcmask 122880
        %903 = vst.msk [vmem:[%s397] sm:$0x1] %vm902, %v899
        %s904 = sand.u32 %s276, 1
        %s905 = scalar_lea.sflag [#allocation4], %s904
        %s906 = sand.u32 %s276, 1
        %s907 = scalar_lea.vmem [#allocation3], %s906
        // Predicated region
        $region65: #{tpu_custom_call.1} parent=63 // pred_check
          %p908 = pneg %p286
        $region66: #{tpu_custom_call.1} parent=63 // pred_check_branch
          %910 = sbr.rel (%p908) target = $region68
        $region67: #{tpu_custom_call.1} parent=63 // pred_region
          %s912 = ssub.s32 16, 16
          %913 = vsyncadd %s905, %s912
          %s914 = smul.addr %s27, 16
          %s915 = scalar_lea.hbm %s11, %s914
          %s917 = sshll.u32 %s907, 4
          %s918 = int_to_ptr.vmem [resolvable:$true] %s917
          %920 = dma.vmem_to_hbm [thread:$0]  %s918, 16, %s915, %s905
        $region68: #{tpu_custom_call.1} parent=63 // pred_fallthru
          _
      $region64: #{tpu_custom_call.1} parent=5 // pred_fallthru
        _
      %p921 = scmp.le.s32.totalorder 2, %s22
      // Predicated region
      $region69: #{tpu_custom_call.1} parent=5 // pred_check
        %p922 = pneg %p921
      $region70: #{tpu_custom_call.1} parent=5 // pred_check_branch
        %924 = sbr.rel (%p922) target = $region72
      $region71: #{tpu_custom_call.1} parent=5 // pred_region
        %s925 = ssub.s32 %s22, 2
        // Predicated region
        $region73: #{tpu_custom_call.1} parent=71 // pred_check
          %p926 = pneg %p292
        $region74: #{tpu_custom_call.1} parent=71 // pred_check_branch
          %928 = sbr.rel (%p926) target = $region76
        $region75: #{tpu_custom_call.1} parent=71 // pred_region
          %s929 = sand.u32 %s277, 1
          %s930 = scalar_lea.sflag [#allocation4], %s929
          %s931 = sand.u32 %s277, 1
          %s932 = scalar_lea.vmem [#allocation3], %s931
          %933 = dma.done %s930, 16
        $region76: #{tpu_custom_call.1} parent=71 // pred_fallthru
          _
      $region72: #{tpu_custom_call.1} parent=5 // pred_fallthru
        _
    $region6: #{tpu_custom_call.1} parent=1 // loop_footer
      %s26 = sadd.s32 1, %s22
    $region7: #{tpu_custom_call.1} parent=1 // loop_footer_branch
      %21 = sbr.rel target = $region3
    $region8: #{tpu_custom_call.1} parent=1 // loop_exit
      _
    %934 = vsyncpa [#allocation4], 1
    %s935 = scalar_lea.sflag [#allocation4], 1
    %936 = vsyncpa %s935, 1

</llo_original>
